<compile_context>
chip_gen: v7x
topology: tpu7x:2x2x1
jax: 0.10.0
libtpu: 0.0.40
codegen_flags: <defaults>
</compile_context>

<pallas_src>
import functools

import jax
import jax.numpy as jnp
from jax import lax
from jax.experimental import pallas as pl
from jax.experimental.pallas import tpu as pltpu

_EPS = 1e-6  # matches torch.nn.PairwiseDistance default


def _consistency_loss_kernel(e_ref, a_ref, o_ref, *, total_b, tiles_per_core,
                             needs_mask):
    i = pl.program_id(1)

    @pl.when(i == 0)
    def _():
        o_ref[...] = jnp.zeros_like(o_ref)

    tb = e_ref.shape[0]
    diff = e_ref[...].astype(jnp.float32) - a_ref[...].astype(jnp.float32) + _EPS
    sq_sum = jnp.sum(diff * diff, axis=-1, keepdims=True)   # (TB, 1) XLU reduce
    dist = jnp.sqrt(sq_sum)                                  # (TB, 1) EUP

    if needs_mask:
        # Mask rows beyond the logical batch (ragged final tile and/or the
        # clamped padding tile of the 2-way core split). jnp.where is a
        # select, so garbage/NaN from padded rows cannot propagate.
        c = pl.program_id(0)
        start = (c * tiles_per_core + i) * tb
        row_ids = lax.broadcasted_iota(jnp.int32, (tb, 1), 0)
        dist = jnp.where(row_ids < (total_b - start), dist, jnp.float32(0.0))

    # Accumulate into the resident output block (stays in VMEM across the
    # inner "arbitrary" axis); the per-step reduce is hidden under input DMA
    # at these tile sizes.
    o_ref[...] += jnp.sum(dist, keepdims=True).reshape(1, 1, 1)


def _row_multiple(itemsize: int) -> int:
    # dtype-native sublane packing: f32 -> 8 rows, bf16 -> 16, int8/fp8 -> 32.
    return {4: 8, 2: 16, 1: 32}.get(int(itemsize), 8)


def _vmem_budget_and_limit():
    """Generation-aware (working_set_budget_bytes, vmem_limit_bytes)."""
    try:
        cap = int(getattr(pltpu.get_tpu_info(), "vmem_capacity_bytes", 0))
    except Exception:
        cap = 0
    if cap >= 96 * 1024 * 1024:
        # v4/v5e/v6e: 128 MiB physical VMEM -> raise the scoped limit.
        return 28 * 1024 * 1024, 40 * 1024 * 1024
    # v7x (64 MiB physical) or unknown generation: stay within the 32 MiB
    # scoped default (still 2-3x the old 8 MiB budget).
    return 22 * 1024 * 1024, 32 * 1024 * 1024


def _choose_tile(batch, dim, itemsize, budget_bytes):
    """Largest batch tile whose VMEM working set fits the byte budget.

    Working-set per row ~= 2 inputs x 2 pipeline buffers of the lane-padded
    input row, plus f32 intermediates (diff/squares) and the distance column.
    No artificial row cap: only the byte budget bounds the tile.
    """
    padded_d = ((dim + 127) // 128) * 128
    per_row = 4 * padded_d * itemsize + 2 * padded_d * 4 + 512
    tb = budget_bytes // max(per_row, 1)
    mult = _row_multiple(itemsize)
    tb = max(mult, (tb // mult) * mult)
    if batch <= tb:
        return int(batch)   # full-extent block is always a legal block shape
    return int(tb)


def consistency_loss(embeddings, embeddings_aug, weight_loss: float = 1.0,
                     tile_rows: int | None = None):
    """embeddings, embeddings_aug: (B, D), f32 or bf16. Returns scalar f32."""
    assert embeddings.shape == embeddings_aug.shape, "shape mismatch"
    assert embeddings.dtype == embeddings_aug.dtype, "dtype mismatch"
    B, D = embeddings.shape
    itemsize = jnp.dtype(embeddings.dtype).itemsize
    mult = _row_multiple(itemsize)

    budget, vmem_limit = _vmem_budget_and_limit()
    if tile_rows is None:
        tb = _choose_tile(B, D, itemsize, budget)
    else:
        tb = int(tile_rows)
        tb = B if tb >= B else max(mult, (tb // mult) * mult)

    num_tiles = pl.cdiv(B, tb)
    # Two partial sums: the leading "parallel" axis is sharded across both
    # TensorCores on v7x; on 1-TC chips it simply serializes (near-zero cost).
    n_cores = 2 if num_tiles >= 2 else 1
    tiles_per_core = pl.cdiv(num_tiles, n_cores)
    padded_tiles = n_cores * tiles_per_core > num_tiles
    needs_mask = padded_tiles or (num_tiles * tb != B)

    if padded_tiles:
        # Clamp the (at most one) padding tile onto the last real tile so the
        # DMA never reads fully out of bounds; its rows are masked in-kernel.
        def in_map(c, i):
            return (jnp.minimum(c * tiles_per_core + i, num_tiles - 1), 0)
    else:
        def in_map(c, i):
            return (c * tiles_per_core + i, 0)

    kernel = functools.partial(
        _consistency_loss_kernel, total_b=B,
        tiles_per_core=tiles_per_core, needs_mask=needs_mask)

    partials = pl.pallas_call(
        kernel,
        out_shape=jax.ShapeDtypeStruct((n_cores, 1, 1), jnp.float32),
        grid_spec=pltpu.PrefetchScalarGridSpec(
            num_scalar_prefetch=0,
            grid=(n_cores, tiles_per_core),
            in_specs=[
                pl.BlockSpec((tb, D), in_map),
                pl.BlockSpec((tb, D), in_map),
            ],
            out_specs=pl.BlockSpec((1, 1, 1), lambda c, i: (c, 0, 0)),
        ),
        compiler_params=pltpu.CompilerParams(
            dimension_semantics=("parallel", "arbitrary"),
            vmem_limit_bytes=vmem_limit,
        ),
        cost_estimate=pl.CostEstimate(
            flops=int(3 * B * D),
            transcendentals=int(B),
            bytes_accessed=int(2 * B * D * itemsize + 4 * n_cores),
        ),
    )(embeddings, embeddings_aug)

    # mean + weight applied as cheap scalar glue outside the kernel.
    return (weight_loss * jnp.sum(partials) / jnp.float32(B)).astype(jnp.float32)


def _reference(embeddings, embeddings_aug, weight_loss: float = 1.0):
    diff = embeddings.astype(jnp.float32) - embeddings_aug.astype(jnp.float32) + _EPS
    d = jnp.sqrt(jnp.sum(diff * diff, axis=-1))
    return weight_loss * jnp.mean(d)


if __name__ == "__main__":
    key = jax.random.PRNGKey(0)

    # Test 1: small f32 batch (single tile, single partial).
    k1, k2 = jax.random.split(key)
    B, D = 8, 128
    embeddings = jax.random.normal(k1, (B, D), dtype=jnp.float32)
    embeddings_aug = embeddings + 0.1 * jax.random.normal(k2, (B, D), dtype=jnp.float32)
    loss = jax.block_until_ready(consistency_loss(embeddings, embeddings_aug, 1.0))
    ref = _reference(embeddings, embeddings_aug, 1.0)
    assert jnp.allclose(loss, ref, rtol=1e-5, atol=1e-6), (loss, ref)

    # Test 2: ragged batch, bf16 inputs, forced multi-tile -> exercises the
    # 2-partial split, the clamped padding tile and the ragged-row mask.
    k3, k4 = jax.random.split(k2)
    B2, D2 = 37, 256
    e2 = jax.random.normal(k3, (B2, D2), dtype=jnp.float32).astype(jnp.bfloat16)
    a2 = jax.random.normal(k4, (B2, D2), dtype=jnp.float32).astype(jnp.bfloat16)
    loss2 = jax.block_until_ready(consistency_loss(e2, a2, 0.5, tile_rows=16))
    ref2 = _reference(e2, a2, 0.5)
    assert jnp.allclose(loss2, ref2, rtol=1e-4, atol=1e-5), (loss2, ref2)

    # Test 3: aligned multi-tile, f32 -> exercises the mask-free fast path
    # with the 2-way partial-sum split.
    k5, k6 = jax.random.split(k4)
    B3, D3 = 64, 128
    e3 = jax.random.normal(k5, (B3, D3), dtype=jnp.float32)
    a3 = e3 + 0.05 * jax.random.normal(k6, (B3, D3), dtype=jnp.float32)
    loss3 = jax.block_until_ready(consistency_loss(e3, a3, 2.0, tile_rows=16))
    ref3 = _reference(e3, a3, 2.0)
    assert jnp.allclose(loss3, ref3, rtol=1e-5, atol=1e-6), (loss3, ref3)

    print("KERNEL_OK")
</pallas_src>

<mosaic_0001>
module attributes {stable_mosaic.version = 11 : i64} {
  func.func @_consistency_loss_kernel(%arg0: i32, %arg1: i32, %arg2: memref<8x128xf32, #tpu.memory_space<vmem>>, %arg3: memref<8x128xf32, #tpu.memory_space<vmem>>, %arg4: memref<1x1x1xf32, #tpu.memory_space<vmem>>) attributes {dimension_semantics = [#tpu.dimension_semantics<parallel>, #tpu.dimension_semantics<arbitrary>], iteration_bounds = array<i64: 1, 1>, scalar_prefetch = 0 : i64, scratch_operands = 0 : i64, tpu.core_type = #tpu.core_type<tc>, window_params = [{transform_indices = @transform_0, window_bounds = array<i64: 8, 128>}, {transform_indices = @transform_1, window_bounds = array<i64: 8, 128>}, {transform_indices = @transform_2, window_bounds = array<i64: 1, 1, 1>}]} {
    %c0_i32 = arith.constant 0 : i32
    %0 = arith.cmpi eq, %arg1, %c0_i32 : i32
    %1 = arith.extui %0 : i1 to i32
    %c0_i32_0 = arith.constant 0 : i32
    %2 = arith.cmpi ne, %1, %c0_i32_0 : i32
    scf.if %2 {
      %cst_12 = arith.constant 0.000000e+00 : f32
      %21 = vector.broadcast %cst_12 : f32 to vector<1x1x1xf32>
      %c0_13 = arith.constant 0 : index
      %c0_14 = arith.constant 0 : index
      %c0_15 = arith.constant 0 : index
      %22 = vector.load %arg4[%c0_13, %c0_14, %c0_15] : memref<1x1x1xf32, #tpu.memory_space<vmem>>, vector<1x1x1xf32>
      tpu.vector_store %arg4[%c0_13, %c0_14, %c0_15], %21 {strides = array<i32>} : memref<1x1x1xf32, #tpu.memory_space<vmem>>, vector<1x1x1xf32>,
    } else {
    }
    %c0 = arith.constant 0 : index
    %c0_1 = arith.constant 0 : index
    %3 = vector.load %arg2[%c0, %c0_1] : memref<8x128xf32, #tpu.memory_space<vmem>>, vector<8x128xf32>
    %c0_2 = arith.constant 0 : index
    %c0_3 = arith.constant 0 : index
    %4 = vector.load %arg3[%c0_2, %c0_3] : memref<8x128xf32, #tpu.memory_space<vmem>>, vector<8x128xf32>
    %5 = arith.subf %3, %4 : vector<8x128xf32>
    %cst = arith.constant 9.99999997E-7 : f32
    %6 = vector.broadcast %cst : f32 to vector<8x128xf32>
    %7 = arith.addf %5, %6 : vector<8x128xf32>
    %8 = arith.mulf %7, %7 : vector<8x128xf32>
    %cst_4 = arith.constant dense<0.000000e+00> : vector<8xf32>
    %9 = vector.multi_reduction <add>, %8, %cst_4 [1] : vector<8x128xf32> to vector<8xf32>
    %10 = vector.shape_cast %9 : vector<8xf32> to vector<8x1xf32>
    %11 = math.sqrt %10 : vector<8x1xf32>
    %c0_5 = arith.constant 0 : index
    %c0_6 = arith.constant 0 : index
    %c0_7 = arith.constant 0 : index
    %12 = vector.load %arg4[%c0_5, %c0_6, %c0_7] : memref<1x1x1xf32, #tpu.memory_space<vmem>>, vector<1x1x1xf32>
    %13 = vector.shape_cast %11 : vector<8x1xf32> to vector<1x8x1xf32>
    %cst_8 = arith.constant dense<0.000000e+00> : vector<1xf32>
    %14 = vector.multi_reduction <add>, %13, %cst_8 [1, 2] : vector<1x8x1xf32> to vector<1xf32>
    %15 = vector.shape_cast %14 : vector<1xf32> to vector<1x1x1xf32>
    %16 = vector.extract %15[0, 0, 0] : f32 from vector<1x1x1xf32>
    %17 = vector.broadcast %16 : f32 to vector<1x1xf32>
    %18 = vector.shape_cast %17 : vector<1x1xf32> to vector<1x1x1xf32>
    %19 = arith.addf %12, %18 : vector<1x1x1xf32>
    %c0_9 = arith.constant 0 : index
    %c0_10 = arith.constant 0 : index
    %c0_11 = arith.constant 0 : index
    %20 = vector.load %arg4[%c0_9, %c0_10, %c0_11] : memref<1x1x1xf32, #tpu.memory_space<vmem>>, vector<1x1x1xf32>
    tpu.vector_store %arg4[%c0_9, %c0_10, %c0_11], %19 {strides = array<i32>} : memref<1x1x1xf32, #tpu.memory_space<vmem>>, vector<1x1x1xf32>,
    return
  }
  func.func @transform_0(%arg0: i32, %arg1: i32) -> (i32, i32) {
    %c1_i32 = arith.constant 1 : i32
    %0 = arith.muli %arg0, %c1_i32 : i32
    %1 = arith.addi %0, %arg1 : i32
    %c0_i32 = arith.constant 0 : i32
    %c0_i32_0 = arith.constant 0 : i32
    return %1, %c0_i32 : i32, i32
  }
  func.func @transform_1(%arg0: i32, %arg1: i32) -> (i32, i32) {
    %c1_i32 = arith.constant 1 : i32
    %0 = arith.muli %arg0, %c1_i32 : i32
    %1 = arith.addi %0, %arg1 : i32
    %c0_i32 = arith.constant 0 : i32
    %c0_i32_0 = arith.constant 0 : i32
    return %1, %c0_i32 : i32, i32
  }
  func.func @transform_2(%arg0: i32, %arg1: i32) -> (i32, i32, i32) {
    %c0_i32 = arith.constant 0 : i32
    %c0_i32_0 = arith.constant 0 : i32
    %c0_i32_1 = arith.constant 0 : i32
    return %arg0, %c0_i32, %c0_i32_0 : i32, i32, i32
  }
}

</mosaic_0001>

<llo_original>
// kernel: tpu_custom_call.1
$region0: #{tpu_custom_call.1}
  #allocation0 [shape = 'u32[]', space=smem, size = 0x4, offset = 0x4, fixed_abs, tag = 'smem constant byte address 0x4 - core index']
  #allocation1 [shape = 'u32[144,128]{1,0:T(1,128)}', space=vmem, size = 0x12000, scoped, tag = 'internal scratch']
  %s0 = inlined_call_operand.hbm [shape: f32[8,128], index: 0, kind: input, shape index: {}]
  %s1 = inlined_call_operand.hbm [shape: f32[8,128], index: 1, kind: input, shape index: {}]
  %s2 = inlined_call_operand.hbm [shape: f32[1,1,1], index: 2, kind: output, shape index: {}]
  %s3 = sld [smem:[#allocation0]]
  $region30: #{tpu_custom_call.1} parent=0
    _
  %s5 = ssub.s32 1, %s3
  %s6 = scalar_select 0, %s5, %s3
  $region1: #{tpu_custom_call.1} parent=0
    #allocation2 [shape = 'u8[4096]{0}', space=vmem, size = 0x1000, scoped, tag = 'input window, operand 0, single buffered']
    #allocation3 [shape = 's32[1]{0}', space=sflag, size = 0x4, scoped, tag = 'scoped memory for tpu_custom_call.1']
    #allocation4 [shape = 's32[1]{0}', space=sflag, size = 0x4, scoped, tag = 'scoped memory for tpu_custom_call.1']
    #allocation5 [shape = 'u8[4096]{0}', space=vmem, size = 0x1000, scoped, tag = 'input window, operand 1, single buffered']
    #allocation6 [shape = 's32[1]{0}', space=sflag, size = 0x4, scoped, tag = 'scoped memory for tpu_custom_call.1']
    #allocation7 [shape = 'u8[512]{0}', space=vmem, size = 0x400, scoped, tag = 'output window, operand 0, single buffered']
    %7 = vsyncpa [#allocation3], 0
    %8 = vsyncpa [#allocation6], 0
    %9 = vsyncpa [#allocation4], 0
    // Predicated region
    $region2: #{tpu_custom_call.1} parent=1 // pred_check
      _
    $region3: #{tpu_custom_call.1} parent=1 // pred_check_branch
      %11 = sbr.rel (0) target = $region5
    $region4: #{tpu_custom_call.1} parent=1 // pred_region
      %s12 = sadd.s32 0, 0
      %s14 = ssub.s32 128, 128
      %15 = vsyncadd [#allocation3], %s14
      %s16 = smul.addr %s12, 128
      %s17 = scalar_lea.hbm %s0, %s16
      %s19 = sshll.u32 [#allocation2], 4
      %s20 = int_to_ptr.vmem [resolvable:$true] %s19
      %22 = dma.hbm_to_vmem [thread:$0]  %s17, 128, %s20, [#allocation3]
    $region5: #{tpu_custom_call.1} parent=1 // pred_fallthru
      _
    // Predicated region
    $region6: #{tpu_custom_call.1} parent=1 // pred_check
      _
    $region7: #{tpu_custom_call.1} parent=1 // pred_check_branch
      %24 = sbr.rel (0) target = $region9
    $region8: #{tpu_custom_call.1} parent=1 // pred_region
      %s25 = sadd.s32 0, 0
      %s27 = ssub.s32 128, 128
      %28 = vsyncadd [#allocation6], %s27
      %s29 = smul.addr %s25, 128
      %s30 = scalar_lea.hbm %s1, %s29
      %s32 = sshll.u32 [#allocation5], 4
      %s33 = int_to_ptr.vmem [resolvable:$true] %s32
      %35 = dma.hbm_to_vmem [thread:$0]  %s30, 128, %s33, [#allocation6]
    $region9: #{tpu_custom_call.1} parent=1 // pred_fallthru
      _
    // Predicated region
    $region10: #{tpu_custom_call.1} parent=1 // pred_check
      _
    $region11: #{tpu_custom_call.1} parent=1 // pred_check_branch
      %37 = sbr.rel (0) target = $region13
    $region12: #{tpu_custom_call.1} parent=1 // pred_region
      %38 = dma.done [#allocation3], 128
    $region13: #{tpu_custom_call.1} parent=1 // pred_fallthru
      _
    // Predicated region
    $region14: #{tpu_custom_call.1} parent=1 // pred_check
      _
    $region15: #{tpu_custom_call.1} parent=1 // pred_check_branch
      %40 = sbr.rel (0) target = $region17
    $region16: #{tpu_custom_call.1} parent=1 // pred_region
      %41 = dma.done [#allocation6], 128
    $region17: #{tpu_custom_call.1} parent=1 // pred_fallthru
      _
    %s42 = sadd.s32 0, 0
    %s43 = sadd.s32 0, 0
    %p44 = scmp.eq.s32.totalorder 0, 0
    // Predicated region
    $region18: #{tpu_custom_call.1} parent=1 // pred_check
      %p45 = pneg %p44
    $region19: #{tpu_custom_call.1} parent=1 // pred_check_branch
      %47 = sbr.rel (%p45) target = $region21
    $region20: #{tpu_custom_call.1} parent=1 // pred_region
      %vm48 = vcmask 0
      %49 = vst.msk [vmem:[#allocation7] sm:$0x1] %vm48, 0.0
    $region21: #{tpu_custom_call.1} parent=1 // pred_fallthru
      _
    %v50 = vld [vmem:[#allocation2] sm:$0xff]
    %v51 = vld [vmem:[#allocation5] sm:$0xff]
    %v52 = vsub.f32 %v50, %v51
    %v53 = vadd.f32 %v52, 1e-06
    %v54 = vmul.f32 %v53, %v53
    %55 = vadd.xlane.f32.xlu0 %v54
    %v56 = vpop.xlane.xlu0 %55
    %v57 = vrsqrt.pop %v56
    %v58 = vmul.f32 %v56, %v57
    %vm59 = vcmp.eq.f32.partialorder %v56, inf
    %v60 = vsel %vm59, %v56, %v58
    %vm61 = vcmp.eq.f32.partialorder %v56, 0.0
    %v62 = vand.u32 %v56, 2147483648
    %v63 = vsel %vm61, %v62, %v60
    %v64 = vld [vmem:[#allocation7] sm:$0x1]
    %vm65 = vcmask 7168
    %v66 = vsel %vm65, %v63, 0.0
    %67 = vadd.xlane.f32.xlu0 %v66
    %v68 = vpop.xlane.xlu0 %67
    %v69 = vrot.slane %v68, 4
    %v70 = vadd.f32 %v68, %v69
    %v71 = vrot.slane %v70, 2
    %v72 = vadd.f32 %v70, %v71
    %v73 = vrot.slane %v72, 1
    %v74 = vadd.f32 %v72, %v73
    %s75 = vtos %v74
    %v76 = vstv %s75
    %v77 = vadd.f32 %v64, %v76
    %vm78 = vcmask 0
    %79 = vst.msk [vmem:[#allocation7] sm:$0x1] %vm78, %v77
    // Predicated region
    $region22: #{tpu_custom_call.1} parent=1 // pred_check
      _
    $region23: #{tpu_custom_call.1} parent=1 // pred_check_branch
      %81 = sbr.rel (0) target = $region25
    $region24: #{tpu_custom_call.1} parent=1 // pred_region
      %s83 = ssub.s32 16, 16
      %84 = vsyncadd [#allocation4], %s83
      %s86 = sshll.u32 [#allocation7], 4
      %s87 = int_to_ptr.vmem [resolvable:$true] %s86
      %89 = dma.vmem_to_hbm [thread:$0]  %s87, 16, %s2, [#allocation4]
    $region25: #{tpu_custom_call.1} parent=1 // pred_fallthru
      _
    // Predicated region
    $region26: #{tpu_custom_call.1} parent=1 // pred_check
      _
    $region27: #{tpu_custom_call.1} parent=1 // pred_check_branch
      %91 = sbr.rel (0) target = $region29
    $region28: #{tpu_custom_call.1} parent=1 // pred_region
      %92 = dma.done [#allocation4], 16
    $region29: #{tpu_custom_call.1} parent=1 // pred_fallthru
      _
    %93 = vsyncpa [#allocation3], 1
    %94 = vsyncpa [#allocation6], 1
    %95 = vsyncpa [#allocation4], 1

</llo_original>
